<compile_context>
chip_gen: v7x
topology: tpu7x:2x2x1
jax: 0.10.0
libtpu: 0.0.40
codegen_flags: <defaults>
</compile_context>

<pallas_src>
import functools

import jax
import jax.numpy as jnp
from jax.experimental import pallas as pl
from jax.experimental.pallas import tpu as pltpu

_LANE = 128
_TARGET_TILE_BYTES = 2 << 20  # ~2 MiB of f32 per block per array


def _neg_emotion_penalty_kernel(params_ref, x_ref, out_ref, *, threshold):
    """out = where(x < thr, max(cur, penalty), max(cur, 0)) -- single cmp+select."""
    x = x_ref[...].astype(jnp.float32)           # in-register cast, free on VPU
    below = x < jnp.float32(threshold)
    # params_ref (SMEM, f32[2]):  [0] = max(cur, penalty_value), [1] = max(cur, 0)
    out_ref[...] = jnp.where(below, params_ref[0], params_ref[1])


def _choose_layout(n):
    """Pick (rows, width, pad) for a lane-dense 2-D view of a flat length-n array."""
    if n % _LANE == 0:
        width = _LANE
        for w in (4096, 2048, 1024, 512, 256):
            if n % w == 0:
                width = w
                break
        return n // width, width, 0
    # Ragged element count: a small pad copy is unavoidable to get lane density.
    width = 1024 if n >= 1024 else _LANE
    padded = ((n + width - 1) // width) * width
    return padded // width, width, padded - n


def _choose_tile_rows(rows, width):
    """Largest tile (multiple of 8 rows) near the ~2 MiB target that fits the slab."""
    t = max(8, (_TARGET_TILE_BYTES // (width * 4)) // 8 * 8)
    return rows if rows <= t else t


def negative_emotion_penalty(emotion_value,
                             current_penalty,
                             *,
                             penalty_value=-1.0,
                             neg_emotion_threshold=-0.2):
    """Returns max(current_penalty, where(x < thr, penalty, 0)) with x's shape (f32)."""
    orig_shape = emotion_value.shape
    flat = emotion_value.reshape(-1)             # native dtype, no astype copy
    n = flat.shape[0]

    rows, width, pad = _choose_layout(n)
    if pad:
        flat = jnp.pad(flat, (0, pad))           # only when n is not lane-aligned
    x2d = flat.reshape(rows, width)

    cur = jnp.asarray(current_penalty, jnp.float32).reshape(-1)[0]
    params = jnp.stack([jnp.maximum(cur, jnp.float32(penalty_value)),
                        jnp.maximum(cur, jnp.float32(0.0))])   # (2,) f32 -> SMEM

    tile_rows = _choose_tile_rows(rows, width)
    grid = (pl.cdiv(rows, tile_rows),)

    kernel = functools.partial(_neg_emotion_penalty_kernel,
                               threshold=float(neg_emotion_threshold))

    out2d = pl.pallas_call(
        kernel,
        out_shape=jax.ShapeDtypeStruct((rows, width), jnp.float32),
        grid_spec=pltpu.PrefetchScalarGridSpec(
            num_scalar_prefetch=0,
            grid=grid,
            in_specs=[
                pl.BlockSpec(memory_space=pltpu.SMEM),                  # params (2,)
                pl.BlockSpec((tile_rows, width), lambda i: (i, 0)),     # emotion tile
            ],
            out_specs=pl.BlockSpec((tile_rows, width), lambda i: (i, 0)),
        ),
        compiler_params=pltpu.CompilerParams(
            dimension_semantics=("parallel",)),
    )(params, x2d)

    if pad:
        return out2d.reshape(-1)[:n].reshape(orig_shape)
    return out2d.reshape(orig_shape)


def _reference(emotion_value, current_penalty, penalty_value, threshold):
    pen = jnp.where(emotion_value.astype(jnp.float32) < threshold,
                    jnp.float32(penalty_value), jnp.float32(0.0))
    cur = jnp.asarray(current_penalty, jnp.float32).reshape(-1)[0]
    return jnp.maximum(cur, pen)


if __name__ == "__main__":
    key = jax.random.PRNGKey(0)

    # Case 1: module-default state (buffer = 0.0), lane-aligned shape.
    emotion_value = jax.random.uniform(key, (2, 4, 16, 16),
                                       minval=-1.0, maxval=1.0, dtype=jnp.float32)
    current_penalty = jnp.zeros((1,), jnp.float32)
    out = negative_emotion_penalty(emotion_value, current_penalty,
                                   penalty_value=-1.0,
                                   neg_emotion_threshold=-0.2)
    out = jax.block_until_ready(out)
    ref = _reference(emotion_value, current_penalty, -1.0, -0.2)
    assert out.shape == emotion_value.shape
    assert jnp.allclose(out, ref), "mismatch vs reference (aligned case)"

    # Case 2: ragged element count + nonzero carried penalty (exercises pad path & max).
    k2 = jax.random.PRNGKey(1)
    ev2 = jax.random.uniform(k2, (3, 7, 5), minval=-1.0, maxval=1.0, dtype=jnp.float32)
    cur2 = jnp.asarray([0.25], jnp.float32)
    out2 = jax.block_until_ready(
        negative_emotion_penalty(ev2, cur2, penalty_value=-1.0, neg_emotion_threshold=-0.2))
    ref2 = _reference(ev2, cur2, -1.0, -0.2)
    assert out2.shape == ev2.shape
    assert jnp.allclose(out2, ref2), "mismatch vs reference (ragged case)"

    print("KERNEL_OK")
</pallas_src>

<mosaic_0001>
module attributes {stable_mosaic.version = 11 : i64} {
  func.func @_neg_emotion_penalty_kernel(%arg0: i32, %arg1: memref<2xf32, #tpu.memory_space<smem>>, %arg2: memref<1x2048xf32, #tpu.memory_space<vmem>>, %arg3: memref<1x2048xf32, #tpu.memory_space<vmem>>) attributes {dimension_semantics = [#tpu.dimension_semantics<parallel>], iteration_bounds = array<i64: 1>, scalar_prefetch = 0 : i64, scratch_operands = 0 : i64, tpu.core_type = #tpu.core_type<tc>, window_params = [{transform_indices = @transform_0, window_bounds = array<i64: 2>}, {transform_indices = @transform_1, window_bounds = array<i64: 1, 2048>}, {transform_indices = @transform_2, window_bounds = array<i64: 1, 2048>}]} {
    %c0 = arith.constant 0 : index
    %c0_0 = arith.constant 0 : index
    %0 = vector.load %arg2[%c0, %c0_0] : memref<1x2048xf32, #tpu.memory_space<vmem>>, vector<1x2048xf32>
    %cst = arith.constant -2.000000e-01 : f32
    %1 = vector.broadcast %cst : f32 to vector<1x2048xf32>
    %2 = arith.cmpf olt, %0, %1 : vector<1x2048xf32>
    %c0_1 = arith.constant 0 : index
    %3 = memref.load %arg1[%c0_1] : memref<2xf32, #tpu.memory_space<smem>>
    %c1 = arith.constant 1 : index
    %4 = memref.load %arg1[%c1] : memref<2xf32, #tpu.memory_space<smem>>
    %5 = vector.broadcast %3 : f32 to vector<1x2048xf32>
    %6 = vector.broadcast %4 : f32 to vector<1x2048xf32>
    %7 = arith.select %2, %5, %6 : vector<1x2048xi1>, vector<1x2048xf32>
    %c0_2 = arith.constant 0 : index
    %c0_3 = arith.constant 0 : index
    %8 = vector.load %arg3[%c0_2, %c0_3] : memref<1x2048xf32, #tpu.memory_space<vmem>>, vector<1x2048xf32>
    tpu.vector_store %arg3[%c0_2, %c0_3], %7 {strides = array<i32>} : memref<1x2048xf32, #tpu.memory_space<vmem>>, vector<1x2048xf32>,
    return
  }
  func.func @transform_0(%arg0: i32) -> i32 {
    %c0_i32 = arith.constant 0 : i32
    %c0_i32_0 = arith.constant 0 : i32
    return %c0_i32 : i32
  }
  func.func @transform_1(%arg0: i32) -> (i32, i32) {
    %c0_i32 = arith.constant 0 : i32
    %c0_i32_0 = arith.constant 0 : i32
    return %arg0, %c0_i32 : i32, i32
  }
  func.func @transform_2(%arg0: i32) -> (i32, i32) {
    %c0_i32 = arith.constant 0 : i32
    %c0_i32_0 = arith.constant 0 : i32
    return %arg0, %c0_i32 : i32, i32
  }
}

</mosaic_0001>

<llo_original>
// kernel: tpu_custom_call.1
$region0: #{tpu_custom_call.1}
  #allocation0 [shape = 'u32[]', space=smem, size = 0x4, offset = 0x4, fixed_abs, tag = 'smem constant byte address 0x4 - core index']
  #allocation1 [shape = 'u32[144,128]{1,0:T(1,128)}', space=vmem, size = 0x12000, scoped, tag = 'internal scratch']
  %s0 = inlined_call_operand.hbm [shape: f32[2], index: 0, kind: input, shape index: {}]
  %s1 = inlined_call_operand.hbm [shape: f32[1,2048], index: 1, kind: input, shape index: {}]
  %s2 = inlined_call_operand.hbm [shape: f32[1,2048], index: 2, kind: output, shape index: {}]
  %s3 = sld [smem:[#allocation0]]
  $region26: #{tpu_custom_call.1} parent=0
    _
  %s5 = ssub.s32 1, %s3
  %s6 = scalar_select 0, %s5, %s3
  $region1: #{tpu_custom_call.1} parent=0
    #allocation2 [shape = 'u8[512]{0}', space=smem, size = 0x200, scoped, tag = 'input window, operand 0, single buffered']
    #allocation3 [shape = 's32[1]{0}', space=sflag, size = 0x4, scoped, tag = 'scoped memory for tpu_custom_call.1']
    #allocation4 [shape = 's32[1]{0}', space=sflag, size = 0x4, scoped, tag = 'scoped memory for tpu_custom_call.1']
    #allocation5 [shape = 's32[1]{0}', space=sflag, size = 0x4, scoped, tag = 'scoped memory for tpu_custom_call.1']
    #allocation6 [shape = 'u8[8192]{0}', space=vmem, size = 0x2000, scoped, tag = 'input window, operand 1, single buffered']
    #allocation7 [shape = 'u8[8192]{0}', space=vmem, size = 0x2000, scoped, tag = 'output window, operand 0, single buffered']
    %7 = vsyncpa [#allocation5], 0
    %8 = vsyncpa [#allocation3], 0
    %9 = vsyncpa [#allocation4], 0
    // Predicated region
    $region2: #{tpu_custom_call.1} parent=1 // pred_check
      _
    $region3: #{tpu_custom_call.1} parent=1 // pred_check_branch
      %11 = sbr.rel (0) target = $region5
    $region4: #{tpu_custom_call.1} parent=1 // pred_region
      %s13 = ssub.s32 16, 16
      %14 = vsyncadd [#allocation5], %s13
      %17 = dma.hbm_to_smem %s0, 16, [#allocation2], [#allocation5]
    $region5: #{tpu_custom_call.1} parent=1 // pred_fallthru
      _
    // Predicated region
    $region6: #{tpu_custom_call.1} parent=1 // pred_check
      _
    $region7: #{tpu_custom_call.1} parent=1 // pred_check_branch
      %19 = sbr.rel (0) target = $region9
    $region8: #{tpu_custom_call.1} parent=1 // pred_region
      %s21 = ssub.s32 256, 256
      %22 = vsyncadd [#allocation3], %s21
      %s24 = sshll.u32 [#allocation6], 4
      %s25 = int_to_ptr.vmem [resolvable:$true] %s24
      %27 = dma.hbm_to_vmem [thread:$0]  %s1, 256, %s25, [#allocation3]
    $region9: #{tpu_custom_call.1} parent=1 // pred_fallthru
      _
    // Predicated region
    $region10: #{tpu_custom_call.1} parent=1 // pred_check
      _
    $region11: #{tpu_custom_call.1} parent=1 // pred_check_branch
      %29 = sbr.rel (0) target = $region13
    $region12: #{tpu_custom_call.1} parent=1 // pred_region
      %30 = dma.done [#allocation5], 16
    $region13: #{tpu_custom_call.1} parent=1 // pred_fallthru
      _
    // Predicated region
    $region14: #{tpu_custom_call.1} parent=1 // pred_check
      _
    $region15: #{tpu_custom_call.1} parent=1 // pred_check_branch
      %32 = sbr.rel (0) target = $region17
    $region16: #{tpu_custom_call.1} parent=1 // pred_region
      %33 = dma.done [#allocation3], 256
    $region17: #{tpu_custom_call.1} parent=1 // pred_fallthru
      _
    %34 = sfence
    %v35 = vld [vmem:[#allocation6] sm:$0xff]
    %v36 = vld [vmem:[#allocation6 + $0x8] sm:$0xff]
    %vm37 = vcmp.lt.f32.partialorder %v35, -0.2
    %vm38 = vcmp.lt.f32.partialorder %v36, -0.2
    %s39 = sld [smem:[#allocation2]]
    %s40 = sld [smem:[#allocation2 + $0x1]]
    %v41 = vstv %s39
    %v42 = vstv %s40
    %v43 = vsel %vm37, %v41, %v42
    %v44 = vsel %vm38, %v41, %v42
    %45 = vst [vmem:[#allocation7] sm:$0xff] %v43
    %46 = vst [vmem:[#allocation7 + $0x8] sm:$0xff] %v44
    // Predicated region
    $region18: #{tpu_custom_call.1} parent=1 // pred_check
      _
    $region19: #{tpu_custom_call.1} parent=1 // pred_check_branch
      %48 = sbr.rel (0) target = $region21
    $region20: #{tpu_custom_call.1} parent=1 // pred_region
      %s50 = ssub.s32 256, 256
      %51 = vsyncadd [#allocation4], %s50
      %s53 = sshll.u32 [#allocation7], 4
      %s54 = int_to_ptr.vmem [resolvable:$true] %s53
      %56 = dma.vmem_to_hbm [thread:$0]  %s54, 256, %s2, [#allocation4]
    $region21: #{tpu_custom_call.1} parent=1 // pred_fallthru
      _
    // Predicated region
    $region22: #{tpu_custom_call.1} parent=1 // pred_check
      _
    $region23: #{tpu_custom_call.1} parent=1 // pred_check_branch
      %58 = sbr.rel (0) target = $region25
    $region24: #{tpu_custom_call.1} parent=1 // pred_region
      %59 = dma.done [#allocation4], 256
    $region25: #{tpu_custom_call.1} parent=1 // pred_fallthru
      _
    %60 = vsyncpa [#allocation3], 1
    %61 = vsyncpa [#allocation4], 1
    %62 = vsyncpa [#allocation5], 1

</llo_original>
